<compile_context>
chip_gen: v6e
topology: v6e:2x2x1
jax: 0.10.0
libtpu: 0.0.40
codegen_flags: <defaults>
</compile_context>

<pallas_src>
import jax
import jax.numpy as jnp
from jax.experimental import pallas as pl
from jax.experimental.pallas import tpu as pltpu

_LANE = 128
_DEFAULT_MAX_TILE_ROWS = 2048  # 2048 x 128 x 4B = 1 MiB per f32 input tile.


def _round_up(x, m):
    return ((x + m - 1) // m) * m


def _sq_diff_partial_kernel(p_ref, l_ref, o_ref):
    # p_ref, l_ref: (tile_rows, 128) lane-dense tiles resident in VMEM.
    d = p_ref[...].astype(jnp.float32) - l_ref[...].astype(jnp.float32)
    # Reduce only over the sublane (row) axis; keep the 128-lane vector so the
    # per-tile store is a full, unmasked lane-dense row. The final (tiny) lane
    # reduction happens in the wrapper.
    o_ref[...] = jnp.sum(d * d, axis=0, keepdims=True)[None]  # (1, 1, 128)


def listwise_ranking_loss(predictions, labels, *, max_tile_rows=_DEFAULT_MAX_TILE_ROWS):
    """Pallas equivalent of ListwiseRankingLoss.forward: MSE(predictions[:, :L], labels)."""
    if predictions.ndim != 2 or labels.ndim != 2:
        raise ValueError("expected 2-D predictions and labels")
    L = labels.shape[1]
    # Column slice (no-op when P == L). The slice fuses with the lane-dense
    # reshape/pad copy below, so it does not cost an extra HBM round trip.
    # TODO(synk): for P >> L an in-kernel gather would also avoid copying the
    # dead columns of `predictions`; unnecessary for the shapes exercised here.
    preds = predictions if predictions.shape[1] == L else predictions[:, :L]

    total = preds.shape[0] * preds.shape[1]          # true element count B*L
    rows = -(-total // _LANE)                        # ceil-div
    tile_rows = min(max_tile_rows, _round_up(rows, 8))
    padded_rows = _round_up(rows, tile_rows)
    padded_total = padded_rows * _LANE
    num_tiles = padded_rows // tile_rows

    def to_lane_dense(x):
        flat = x.reshape(-1)
        if padded_total != total:
            flat = jnp.pad(flat, (0, padded_total - total))
        return flat.reshape(padded_rows, _LANE)

    p2 = to_lane_dense(preds)
    l2 = to_lane_dense(labels)

    partials = pl.pallas_call(
        _sq_diff_partial_kernel,
        out_shape=jax.ShapeDtypeStruct((num_tiles, 1, _LANE), jnp.float32),
        grid=(num_tiles,),
        in_specs=[
            pl.BlockSpec((tile_rows, _LANE), lambda i: (i, 0)),
            pl.BlockSpec((tile_rows, _LANE), lambda i: (i, 0)),
        ],
        out_specs=pl.BlockSpec((1, 1, _LANE), lambda i: (i, 0, 0)),
        compiler_params=pltpu.CompilerParams(
            # Per-tile partial sums are independent -> shard across TCs (v7x).
            dimension_semantics=("parallel",),
            # ~4-5 MiB of double-buffered tiles; 32 MiB fits every generation's
            # budget (incl. v7x's 64 MiB physical VMEM) with ample headroom.
            vmem_limit_bytes=32 * 1024 * 1024,
        ),
    )(p2, l2)

    # Trivial wrapper-side finish: global sum of the lane-dense partials,
    # normalized by the true (unpadded) element count.
    return jnp.sum(partials) / jnp.float32(total)


if __name__ == "__main__":
    key = jax.random.PRNGKey(0)
    k1, k2, k3, k4 = jax.random.split(key, 4)

    # Small shapes consistent with the module: predictions [B, P], labels [B, L], L <= P.
    B, P, L = 8, 16, 8
    predictions = jax.random.normal(k1, (B, P), dtype=jnp.float32)
    labels = jax.random.normal(k2, (B, L), dtype=jnp.float32)

    loss = listwise_ranking_loss(predictions, labels)
    jax.block_until_ready(loss)
    ref = jnp.mean((predictions[:, :L] - labels) ** 2)
    assert jnp.allclose(loss, ref, rtol=1e-5, atol=1e-6), (loss, ref)

    # Second (still small) case exercising the multi-tile + zero-padded path.
    B2, P2, L2 = 64, 48, 40
    predictions2 = jax.random.normal(k3, (B2, P2), dtype=jnp.float32)
    labels2 = jax.random.normal(k4, (B2, L2), dtype=jnp.float32)
    loss2 = listwise_ranking_loss(predictions2, labels2, max_tile_rows=16)
    jax.block_until_ready(loss2)
    ref2 = jnp.mean((predictions2[:, :L2] - labels2) ** 2)
    assert jnp.allclose(loss2, ref2, rtol=1e-5, atol=1e-6), (loss2, ref2)

    print("KERNEL_OK")
</pallas_src>

<mosaic_0001>
module attributes {stable_mosaic.version = 11 : i64} {
  func.func @_sq_diff_partial_kernel(%arg0: i32, %arg1: memref<8x128xf32, #tpu.memory_space<vmem>>, %arg2: memref<8x128xf32, #tpu.memory_space<vmem>>, %arg3: memref<1x1x128xf32, #tpu.memory_space<vmem>>) attributes {dimension_semantics = [#tpu.dimension_semantics<parallel>], iteration_bounds = array<i64: 1>, scalar_prefetch = 0 : i64, scratch_operands = 0 : i64, tpu.core_type = #tpu.core_type<tc>, window_params = [{transform_indices = @transform_0, window_bounds = array<i64: 8, 128>}, {transform_indices = @transform_1, window_bounds = array<i64: 8, 128>}, {transform_indices = @transform_2, window_bounds = array<i64: 1, 1, 128>}]} {
    %c0 = arith.constant 0 : index
    %c0_0 = arith.constant 0 : index
    %0 = vector.load %arg1[%c0, %c0_0] : memref<8x128xf32, #tpu.memory_space<vmem>>, vector<8x128xf32>
    %c0_1 = arith.constant 0 : index
    %c0_2 = arith.constant 0 : index
    %1 = vector.load %arg2[%c0_1, %c0_2] : memref<8x128xf32, #tpu.memory_space<vmem>>, vector<8x128xf32>
    %2 = arith.subf %0, %1 : vector<8x128xf32>
    %3 = arith.mulf %2, %2 : vector<8x128xf32>
    %cst = arith.constant dense<0.000000e+00> : vector<128xf32>
    %4 = vector.multi_reduction <add>, %3, %cst [0] : vector<8x128xf32> to vector<128xf32>
    %5 = vector.shape_cast %4 : vector<128xf32> to vector<1x128xf32>
    %6 = vector.shape_cast %5 : vector<1x128xf32> to vector<1x1x128xf32>
    %c0_3 = arith.constant 0 : index
    %c0_4 = arith.constant 0 : index
    %c0_5 = arith.constant 0 : index
    %7 = vector.load %arg3[%c0_3, %c0_4, %c0_5] : memref<1x1x128xf32, #tpu.memory_space<vmem>>, vector<1x1x128xf32>
    tpu.vector_store %arg3[%c0_3, %c0_4, %c0_5], %6 {strides = array<i32>} : memref<1x1x128xf32, #tpu.memory_space<vmem>>, vector<1x1x128xf32>,
    return
  }
  func.func @transform_0(%arg0: i32) -> (i32, i32) {
    %c0_i32 = arith.constant 0 : i32
    %c0_i32_0 = arith.constant 0 : i32
    return %arg0, %c0_i32 : i32, i32
  }
  func.func @transform_1(%arg0: i32) -> (i32, i32) {
    %c0_i32 = arith.constant 0 : i32
    %c0_i32_0 = arith.constant 0 : i32
    return %arg0, %c0_i32 : i32, i32
  }
  func.func @transform_2(%arg0: i32) -> (i32, i32, i32) {
    %c0_i32 = arith.constant 0 : i32
    %c0_i32_0 = arith.constant 0 : i32
    %c0_i32_1 = arith.constant 0 : i32
    return %arg0, %c0_i32, %c0_i32_0 : i32, i32, i32
  }
}

</mosaic_0001>

<llo_original>
// kernel: tpu_custom_call.1
$region0: #{tpu_custom_call.1}
  #allocation0 [shape = 'u32[]', space=smem, size = 0x4, offset = 0x4, fixed_abs, tag = 'smem constant byte address 0x4 - core index']
  #allocation1 [shape = 'u32[144,128]{1,0:T(1,128)}', space=vmem, size = 0x12000, scoped, tag = 'internal scratch']
  %s0 = inlined_call_operand.hbm [shape: f32[8,128], index: 0, kind: input, shape index: {}]
  %s1 = inlined_call_operand.hbm [shape: f32[8,128], index: 1, kind: input, shape index: {}]
  %s2 = inlined_call_operand.hbm [shape: f32[1,1,128], index: 2, kind: output, shape index: {}]
  %s3 = sld [smem:[#allocation0]]
  $region26: #{tpu_custom_call.1} parent=0
    _
  %s5 = ssub.s32 1, %s3
  %s6 = scalar_select 0, %s5, %s3
  $region1: #{tpu_custom_call.1} parent=0
    #allocation2 [shape = 'u8[4096]{0}', space=vmem, size = 0x1000, scoped, tag = 'input window, operand 0, single buffered']
    #allocation3 [shape = 's32[1]{0}', space=sflag, size = 0x4, scoped, tag = 'scoped memory for tpu_custom_call.1']
    #allocation4 [shape = 's32[1]{0}', space=sflag, size = 0x4, scoped, tag = 'scoped memory for tpu_custom_call.1']
    #allocation5 [shape = 'u8[4096]{0}', space=vmem, size = 0x1000, scoped, tag = 'input window, operand 1, single buffered']
    #allocation6 [shape = 's32[1]{0}', space=sflag, size = 0x4, scoped, tag = 'scoped memory for tpu_custom_call.1']
    #allocation7 [shape = 'u8[512]{0}', space=vmem, size = 0x400, scoped, tag = 'output window, operand 0, single buffered']
    %7 = vsyncpa [#allocation3], 0
    %8 = vsyncpa [#allocation6], 0
    %9 = vsyncpa [#allocation4], 0
    // Predicated region
    $region2: #{tpu_custom_call.1} parent=1 // pred_check
      _
    $region3: #{tpu_custom_call.1} parent=1 // pred_check_branch
      %11 = sbr.rel (0) target = $region5
    $region4: #{tpu_custom_call.1} parent=1 // pred_region
      %s13 = ssub.s32 128, 128
      %14 = vsyncadd [#allocation3], %s13
      %s16 = sshll.u32 [#allocation2], 4
      %s17 = int_to_ptr.vmem [resolvable:$true] %s16
      %19 = dma.hbm_to_vmem [thread:$0]  %s0, 128, %s17, [#allocation3]
    $region5: #{tpu_custom_call.1} parent=1 // pred_fallthru
      _
    // Predicated region
    $region6: #{tpu_custom_call.1} parent=1 // pred_check
      _
    $region7: #{tpu_custom_call.1} parent=1 // pred_check_branch
      %21 = sbr.rel (0) target = $region9
    $region8: #{tpu_custom_call.1} parent=1 // pred_region
      %s23 = ssub.s32 128, 128
      %24 = vsyncadd [#allocation6], %s23
      %s26 = sshll.u32 [#allocation5], 4
      %s27 = int_to_ptr.vmem [resolvable:$true] %s26
      %29 = dma.hbm_to_vmem [thread:$0]  %s1, 128, %s27, [#allocation6]
    $region9: #{tpu_custom_call.1} parent=1 // pred_fallthru
      _
    // Predicated region
    $region10: #{tpu_custom_call.1} parent=1 // pred_check
      _
    $region11: #{tpu_custom_call.1} parent=1 // pred_check_branch
      %31 = sbr.rel (0) target = $region13
    $region12: #{tpu_custom_call.1} parent=1 // pred_region
      %32 = dma.done [#allocation3], 128
    $region13: #{tpu_custom_call.1} parent=1 // pred_fallthru
      _
    // Predicated region
    $region14: #{tpu_custom_call.1} parent=1 // pred_check
      _
    $region15: #{tpu_custom_call.1} parent=1 // pred_check_branch
      %34 = sbr.rel (0) target = $region17
    $region16: #{tpu_custom_call.1} parent=1 // pred_region
      %35 = dma.done [#allocation6], 128
    $region17: #{tpu_custom_call.1} parent=1 // pred_fallthru
      _
    %v36 = vld [vmem:[#allocation2] sm:$0xff]
    %v37 = vld [vmem:[#allocation5] sm:$0xff]
    %v38 = vsub.f32 %v36, %v37
    %v39 = vmul.f32 %v38, %v38
    %v40 = vrot.slane %v39, 4
    %v41 = vadd.f32 %v39, %v40
    %v42 = vrot.slane %v41, 2
    %v43 = vadd.f32 %v41, %v42
    %v44 = vrot.slane %v43, 1
    %v45 = vadd.f32 %v43, %v44
    %46 = vst [vmem:[#allocation7] sm:$0x1] %v45
    // Predicated region
    $region18: #{tpu_custom_call.1} parent=1 // pred_check
      _
    $region19: #{tpu_custom_call.1} parent=1 // pred_check_branch
      %48 = sbr.rel (0) target = $region21
    $region20: #{tpu_custom_call.1} parent=1 // pred_region
      %s50 = ssub.s32 16, 16
      %51 = vsyncadd [#allocation4], %s50
      %s53 = sshll.u32 [#allocation7], 4
      %s54 = int_to_ptr.vmem [resolvable:$true] %s53
      %56 = dma.vmem_to_hbm [thread:$0]  %s54, 16, %s2, [#allocation4]
    $region21: #{tpu_custom_call.1} parent=1 // pred_fallthru
      _
    // Predicated region
    $region22: #{tpu_custom_call.1} parent=1 // pred_check
      _
    $region23: #{tpu_custom_call.1} parent=1 // pred_check_branch
      %58 = sbr.rel (0) target = $region25
    $region24: #{tpu_custom_call.1} parent=1 // pred_region
      %59 = dma.done [#allocation4], 16
    $region25: #{tpu_custom_call.1} parent=1 // pred_fallthru
      _
    %60 = vsyncpa [#allocation3], 1
    %61 = vsyncpa [#allocation6], 1
    %62 = vsyncpa [#allocation4], 1

</llo_original>
